<compile_context>
chip_gen: v6e
topology: v6e:2x2x1
jax: 0.10.0
libtpu: 0.0.40
codegen_flags: <defaults>
</compile_context>

<pallas_src>
import jax
import jax.numpy as jnp
from jax.experimental import pallas as pl
from jax.experimental.pallas import tpu as pltpu

HIDDEN = 128


def _round_up(a, b):
    return (a + b - 1) // b * b


def mlp_dropout_kernel(seed_ref, b2_ref, x_ref, w1_ref, b1_ref, w2_ref, o_ref):
    # ---- layer_1: x @ W1^T + b1  (bf16 x bf16 -> f32 accumulate on MXU) ----
    h = jnp.dot(x_ref[...], w1_ref[...], preferred_element_type=jnp.float32)
    h = h + b1_ref[...]                      # (TB, 128) + (1, 128) broadcast

    tb, hd = h.shape

    # ---- fused ReLU + dropout(p=0.5), inverted scaling ----
    # Counter-based hash PRNG (lowbias32) keyed on (seed, global element index)
    # so every batch tile gets a distinct mask.
    row0 = pl.program_id(0) * tb
    rows = jax.lax.broadcasted_iota(jnp.int32, (tb, hd), 0) + row0
    cols = jax.lax.broadcasted_iota(jnp.int32, (tb, hd), 1)
    idx = rows * hd + cols                                   # unique per element
    z = idx.astype(jnp.uint32) + seed_ref[0].astype(jnp.uint32)
    z = (z ^ (z >> 16)) * jnp.uint32(0x7FEB352D)
    z = (z ^ (z >> 15)) * jnp.uint32(0x846CA68B)
    z = z ^ (z >> 16)
    keep = (z >> 31) == jnp.uint32(0)                        # P(keep) = 0.5
    h = jnp.where(keep & (h > 0.0), h * 2.0, 0.0)            # relu+dropout, f32

    # ---- layer_out: lane-dense (1, TB) result = w2 @ h^T + b2 ----
    out_blk = jax.lax.dot_general(
        w2_ref[...], h,
        dimension_numbers=(((1,), (1,)), ((), ())),          # contract hidden dims
        preferred_element_type=jnp.float32)                  # (1, TB)
    o_ref[...] = (out_blk + b2_ref[0]).astype(o_ref.dtype)


def pytorch_regression_forward(x, w1, b1, w2, b2, seed=0, block_rows=512):
    """x: [B, F] float; w1: [128, F]; b1: [128]; w2: [1, 128]; b2: [1] -> [B, 1]."""
    B, F = x.shape
    H = w1.shape[0]  # 128

    # Batch tile: 512 rows for large batches (keeps double-buffered x well under
    # the v7x 32 MiB scoped-VMEM budget even for large F); small batches use one
    # full-size tile rounded up to a multiple of 8 sublanes.
    TB = min(block_rows, _round_up(B, 8))
    B_pad = _round_up(B, TB)
    if B_pad != B:
        x = jnp.pad(x, ((0, B_pad - B), (0, 0)))
    num_tiles = B_pad // TB

    # bf16 inputs for the MXU / halved HBM traffic; accumulation stays f32.
    # (In a real model the transposed bf16 weights would be prepared once at
    #  parameter-prep time, outside the hot path.)
    x_in = x.astype(jnp.bfloat16)
    w1_t = jnp.asarray(w1, jnp.bfloat16).T                   # (F, 128)
    b1_2d = jnp.asarray(b1, jnp.float32).reshape(1, H)
    w2_2d = jnp.asarray(w2, jnp.float32).reshape(1, H)
    b2_1d = jnp.asarray(b2, jnp.float32).reshape(1)
    seed_arr = jnp.asarray([seed], dtype=jnp.int32)

    out = pl.pallas_call(
        mlp_dropout_kernel,
        out_shape=jax.ShapeDtypeStruct((1, B_pad), jnp.float32),
        grid=(num_tiles,),
        in_specs=[
            pl.BlockSpec(memory_space=pltpu.MemorySpace.SMEM),   # seed (scalar path)
            pl.BlockSpec(memory_space=pltpu.MemorySpace.SMEM),   # b2   (scalar path)
            pl.BlockSpec((TB, F), lambda i: (i, 0)),             # x tile (pipelined)
            pl.BlockSpec((F, H), lambda i: (0, 0)),              # w1^T (resident)
            pl.BlockSpec((1, H), lambda i: (0, 0)),              # b1   (resident)
            pl.BlockSpec((1, H), lambda i: (0, 0)),              # w2   (resident)
        ],
        out_specs=pl.BlockSpec((1, TB), lambda i: (0, i)),       # lane-dense output
        compiler_params=pltpu.CompilerParams(
            dimension_semantics=("parallel",)),                   # megacore on v7x
    )(seed_arr, b2_1d, x_in, w1_t, b1_2d, w2_2d)

    return out[0, :B].reshape(B, 1)


if __name__ == "__main__":
    B = 8              # batch
    NUM_FEATURES = 32  # num_features passed to PytorchRegression

    key = jax.random.PRNGKey(0)
    kx, k1, k2, k3, k4 = jax.random.split(key, 5)

    # Deterministic init mimicking nn.Linear's U(-1/sqrt(fan_in), +1/sqrt(fan_in)).
    x = jax.random.normal(kx, (B, NUM_FEATURES), dtype=jnp.float32)

    bound1 = 1.0 / (NUM_FEATURES ** 0.5)
    w1 = jax.random.uniform(k1, (HIDDEN, NUM_FEATURES), jnp.float32, -bound1, bound1)
    b1 = jax.random.uniform(k2, (HIDDEN,), jnp.float32, -bound1, bound1)

    bound2 = 1.0 / (HIDDEN ** 0.5)
    w2 = jax.random.uniform(k3, (1, HIDDEN), jnp.float32, -bound2, bound2)
    b2 = jax.random.uniform(k4, (1,), jnp.float32, -bound2, bound2)

    out = pytorch_regression_forward(x, w1, b1, w2, b2, seed=1234)
    out = jax.block_until_ready(out)

    assert out.shape == (B, 1) and out.dtype == jnp.float32
    assert bool(jnp.all(jnp.isfinite(out)))
    print("KERNEL_OK")
</pallas_src>

<mosaic_0001>
module attributes {stable_mosaic.version = 11 : i64} {
  func.func @mlp_dropout_kernel(%arg0: i32, %arg1: memref<1xi32, #tpu.memory_space<smem>>, %arg2: memref<1xf32, #tpu.memory_space<smem>>, %arg3: memref<8x32xbf16, #tpu.memory_space<vmem>>, %arg4: memref<32x128xbf16, #tpu.memory_space<vmem>>, %arg5: memref<1x128xf32, #tpu.memory_space<vmem>>, %arg6: memref<1x128xf32, #tpu.memory_space<vmem>>, %arg7: memref<1x8xf32, #tpu.memory_space<vmem>>) attributes {dimension_semantics = [#tpu.dimension_semantics<parallel>], iteration_bounds = array<i64: 1>, scalar_prefetch = 0 : i64, scratch_operands = 0 : i64, tpu.core_type = #tpu.core_type<tc>, window_params = [{transform_indices = @transform_0, window_bounds = array<i64: 1>}, {transform_indices = @transform_1, window_bounds = array<i64: 1>}, {transform_indices = @transform_2, window_bounds = array<i64: 8, 32>}, {pipeline_mode = #tpu.pipeline_mode<synchronous>, transform_indices = @transform_3, window_bounds = array<i64: 32, 128>}, {pipeline_mode = #tpu.pipeline_mode<synchronous>, transform_indices = @transform_4, window_bounds = array<i64: 1, 128>}, {pipeline_mode = #tpu.pipeline_mode<synchronous>, transform_indices = @transform_5, window_bounds = array<i64: 1, 128>}, {transform_indices = @transform_6, window_bounds = array<i64: 1, 8>}]} {
    %c0 = arith.constant 0 : index
    %c0_0 = arith.constant 0 : index
    %0 = vector.load %arg3[%c0, %c0_0] : memref<8x32xbf16, #tpu.memory_space<vmem>>, vector<8x32xbf16>
    %c0_1 = arith.constant 0 : index
    %c0_2 = arith.constant 0 : index
    %1 = vector.load %arg4[%c0_1, %c0_2] : memref<32x128xbf16, #tpu.memory_space<vmem>>, vector<32x128xbf16>
    %cst = arith.constant dense<0.000000e+00> : vector<8x128xf32>
    %2 = tpu.matmul %0, %1, %cst {dimension_numbers = #tpu.dot_dimension_numbers<[1], [0], [0], [1], [0, 0, 1, 1], [], []>} : vector<8x32xbf16>, vector<32x128xbf16>, vector<8x128xf32> -> vector<8x128xf32>
    %c0_3 = arith.constant 0 : index
    %c0_4 = arith.constant 0 : index
    %3 = vector.load %arg5[%c0_3, %c0_4] : memref<1x128xf32, #tpu.memory_space<vmem>>, vector<1x128xf32>
    %4 = vector.broadcast %3 : vector<1x128xf32> to vector<8x128xf32>
    %5 = arith.addf %2, %4 : vector<8x128xf32>
    %c8_i32 = arith.constant 8 : i32
    %6 = arith.muli %arg0, %c8_i32 : i32
    %7 = tpu.iota {dimensions = array<i32: 0>} : vector<8x128xi32>
    %8 = vector.broadcast %6 : i32 to vector<8x128xi32>
    %9 = arith.addi %7, %8 : vector<8x128xi32>
    %10 = tpu.iota {dimensions = array<i32: 1>} : vector<8x128xi32>
    %c128_i32 = arith.constant 128 : i32
    %11 = vector.broadcast %c128_i32 : i32 to vector<8x128xi32>
    %12 = arith.muli %9, %11 : vector<8x128xi32>
    %13 = arith.addi %12, %10 : vector<8x128xi32>
    %c0_5 = arith.constant 0 : index
    %14 = memref.load %arg1[%c0_5] : memref<1xi32, #tpu.memory_space<smem>>
    %15 = vector.broadcast %14 : i32 to vector<8x128xi32>
    %16 = arith.addi %13, %15 : vector<8x128xi32>
    %c16_i32 = arith.constant 16 : i32
    %17 = vector.broadcast %c16_i32 : i32 to vector<8x128xi32>
    %18 = arith.shrui %16, %17 : vector<8x128xi32>
    %19 = arith.xori %16, %18 : vector<8x128xi32>
    %c2146121005_i32 = arith.constant 2146121005 : i32
    %20 = vector.broadcast %c2146121005_i32 : i32 to vector<8x128xi32>
    %21 = arith.muli %19, %20 : vector<8x128xi32>
    %c15_i32 = arith.constant 15 : i32
    %22 = vector.broadcast %c15_i32 : i32 to vector<8x128xi32>
    %23 = arith.shrui %21, %22 : vector<8x128xi32>
    %24 = arith.xori %21, %23 : vector<8x128xi32>
    %c-2073254261_i32 = arith.constant -2073254261 : i32
    %25 = vector.broadcast %c-2073254261_i32 : i32 to vector<8x128xi32>
    %26 = arith.muli %24, %25 : vector<8x128xi32>
    %c16_i32_6 = arith.constant 16 : i32
    %27 = vector.broadcast %c16_i32_6 : i32 to vector<8x128xi32>
    %28 = arith.shrui %26, %27 : vector<8x128xi32>
    %29 = arith.xori %26, %28 : vector<8x128xi32>
    %c31_i32 = arith.constant 31 : i32
    %30 = vector.broadcast %c31_i32 : i32 to vector<8x128xi32>
    %31 = arith.shrui %29, %30 : vector<8x128xi32>
    %c0_i32 = arith.constant 0 : i32
    %32 = vector.broadcast %c0_i32 : i32 to vector<8x128xi32>
    %33 = arith.cmpi eq, %31, %32 : vector<8x128xi32>
    %cst_7 = arith.constant 0.000000e+00 : f32
    %34 = vector.broadcast %cst_7 : f32 to vector<8x128xf32>
    %35 = arith.cmpf ogt, %5, %34 : vector<8x128xf32>
    %36 = arith.andi %33, %35 : vector<8x128xi1>
    %cst_8 = arith.constant 2.000000e+00 : f32
    %37 = vector.broadcast %cst_8 : f32 to vector<8x128xf32>
    %38 = arith.mulf %5, %37 : vector<8x128xf32>
    %cst_9 = arith.constant 0.000000e+00 : f32
    %39 = vector.broadcast %cst_9 : f32 to vector<8x128xf32>
    %40 = arith.select %36, %38, %39 : vector<8x128xi1>, vector<8x128xf32>
    %c0_10 = arith.constant 0 : index
    %c0_11 = arith.constant 0 : index
    %41 = vector.load %arg6[%c0_10, %c0_11] : memref<1x128xf32, #tpu.memory_space<vmem>>, vector<1x128xf32>
    %cst_12 = arith.constant dense<0.000000e+00> : vector<1x8xf32>
    %42 = tpu.matmul %41, %40, %cst_12 {dimension_numbers = #tpu.dot_dimension_numbers<[1], [1], [0], [0], [0, 0, 1, 0], [], []>} : vector<1x128xf32>, vector<8x128xf32>, vector<1x8xf32> -> vector<1x8xf32>
    %c0_13 = arith.constant 0 : index
    %43 = memref.load %arg2[%c0_13] : memref<1xf32, #tpu.memory_space<smem>>
    %44 = vector.broadcast %43 : f32 to vector<1x8xf32>
    %45 = arith.addf %42, %44 : vector<1x8xf32>
    %c0_14 = arith.constant 0 : index
    %c0_15 = arith.constant 0 : index
    %46 = vector.load %arg7[%c0_14, %c0_15] : memref<1x8xf32, #tpu.memory_space<vmem>>, vector<1x8xf32>
    tpu.vector_store %arg7[%c0_14, %c0_15], %45 {strides = array<i32>} : memref<1x8xf32, #tpu.memory_space<vmem>>, vector<1x8xf32>,
    return
  }
  func.func @transform_0(%arg0: i32) -> i32 {
    %c0_i32 = arith.constant 0 : i32
    %c0_i32_0 = arith.constant 0 : i32
    return %c0_i32 : i32
  }
  func.func @transform_1(%arg0: i32) -> i32 {
    %c0_i32 = arith.constant 0 : i32
    %c0_i32_0 = arith.constant 0 : i32
    return %c0_i32 : i32
  }
  func.func @transform_2(%arg0: i32) -> (i32, i32) {
    %c0_i32 = arith.constant 0 : i32
    %c0_i32_0 = arith.constant 0 : i32
    return %arg0, %c0_i32 : i32, i32
  }
  func.func @transform_3(%arg0: i32) -> (i32, i32) {
    %c0_i32 = arith.constant 0 : i32
    %c0_i32_0 = arith.constant 0 : i32
    %c0_i32_1 = arith.constant 0 : i32
    return %c0_i32, %c0_i32_0 : i32, i32
  }
  func.func @transform_4(%arg0: i32) -> (i32, i32) {
    %c0_i32 = arith.constant 0 : i32
    %c0_i32_0 = arith.constant 0 : i32
    %c0_i32_1 = arith.constant 0 : i32
    return %c0_i32, %c0_i32_0 : i32, i32
  }
  func.func @transform_5(%arg0: i32) -> (i32, i32) {
    %c0_i32 = arith.constant 0 : i32
    %c0_i32_0 = arith.constant 0 : i32
    %c0_i32_1 = arith.constant 0 : i32
    return %c0_i32, %c0_i32_0 : i32, i32
  }
  func.func @transform_6(%arg0: i32) -> (i32, i32) {
    %c0_i32 = arith.constant 0 : i32
    %c0_i32_0 = arith.constant 0 : i32
    return %c0_i32, %arg0 : i32, i32
  }
}

</mosaic_0001>

<llo_original>
// kernel: tpu_custom_call.1
$region0: #{tpu_custom_call.1}
  #allocation0 [shape = 'u32[]', space=smem, size = 0x4, offset = 0x4, fixed_abs, tag = 'smem constant byte address 0x4 - core index']
  #allocation1 [shape = 'u32[144,128]{1,0:T(1,128)}', space=vmem, size = 0x12000, scoped, tag = 'internal scratch']
  #allocation2 [shape = 's32[1]{0:T(128)S(6)}', space=smem, size = 0x200, scoped, tag = 'scoped memory for tpu_custom_call.1']
  #allocation3 [shape = 'f32[1]{0:T(128)S(6)}', space=smem, size = 0x200, scoped, tag = 'scoped memory for tpu_custom_call.1']
  %s0 = inlined_call_operand.<no memory space> [shape: s32[1], index: 0, kind: input, shape index: {}]
  %s1 = inlined_call_operand.<no memory space> [shape: f32[1], index: 1, kind: input, shape index: {}]
  %s2 = inlined_call_operand.vmem [shape: bf16[8,32], index: 2, kind: input, shape index: {}]
  %s3 = inlined_call_operand.hbm [shape: bf16[32,128], index: 3, kind: input, shape index: {}]
  %s4 = inlined_call_operand.vmem [shape: f32[1,128], index: 4, kind: input, shape index: {}]
  %s5 = inlined_call_operand.vmem [shape: f32[1,128], index: 5, kind: input, shape index: {}]
  %s6 = inlined_call_operand.hbm [shape: f32[1,8], index: 6, kind: output, shape index: {}]
  %s7 = sld [smem:[#allocation0]]
  $region38: #{tpu_custom_call.1} parent=0
    _
  %s9 = ssub.s32 1, %s7
  %s10 = scalar_select 0, %s9, %s7
  %11 = sst [smem:[#allocation2]] %s0
  %12 = sst [smem:[#allocation3]] %s1
  $region1: #{tpu_custom_call.1} parent=0
    #allocation4 [shape = 'u8[8192]{0}', space=vmem, size = 0x2000, scoped, tag = 'input window, operand 3, single buffered']
    #allocation5 [shape = 's32[1]{0}', space=sflag, size = 0x4, scoped, tag = 'scoped memory for tpu_custom_call.1']
    #allocation6 [shape = 's32[1]{0}', space=sflag, size = 0x4, scoped, tag = 'scoped memory for tpu_custom_call.1']
    #allocation7 [shape = 'u8[512]{0}', space=vmem, size = 0x400, scoped, tag = 'output window, operand 0, single buffered']
    %13 = vsyncpa [#allocation5], 0
    %14 = vsyncpa [#allocation6], 0
    // Predicated region
    $region2: #{tpu_custom_call.1} parent=1 // pred_check
      _
    $region3: #{tpu_custom_call.1} parent=1 // pred_check_branch
      %16 = sbr.rel (0) target = $region5
    $region4: #{tpu_custom_call.1} parent=1 // pred_region
      _
    $region5: #{tpu_custom_call.1} parent=1 // pred_fallthru
      _
    // Predicated region
    $region6: #{tpu_custom_call.1} parent=1 // pred_check
      _
    $region7: #{tpu_custom_call.1} parent=1 // pred_check_branch
      %18 = sbr.rel (0) target = $region9
    $region8: #{tpu_custom_call.1} parent=1 // pred_region
      _
    $region9: #{tpu_custom_call.1} parent=1 // pred_fallthru
      _
    // Predicated region
    $region10: #{tpu_custom_call.1} parent=1 // pred_check
      _
    $region11: #{tpu_custom_call.1} parent=1 // pred_check_branch
      %20 = sbr.rel (0) target = $region13
    $region12: #{tpu_custom_call.1} parent=1 // pred_region
      _
    $region13: #{tpu_custom_call.1} parent=1 // pred_fallthru
      _
    // Predicated region
    $region14: #{tpu_custom_call.1} parent=1 // pred_check
      _
    $region15: #{tpu_custom_call.1} parent=1 // pred_check_branch
      %22 = sbr.rel (0) target = $region17
    $region16: #{tpu_custom_call.1} parent=1 // pred_region
      %s24 = ssub.s32 256, 256
      %25 = vsyncadd [#allocation5], %s24
      %s26 = sshll.u32 [#allocation4], 4
      %s27 = int_to_ptr.vmem [resolvable:$true] %s26
      %32 = dma.hbm_to_vmem [thread:$0]  %s3, 256, %s27, [#allocation5], 64, 64, 4
    $region17: #{tpu_custom_call.1} parent=1 // pred_fallthru
      _
    // Predicated region
    $region18: #{tpu_custom_call.1} parent=1 // pred_check
      _
    $region19: #{tpu_custom_call.1} parent=1 // pred_check_branch
      %34 = sbr.rel (0) target = $region21
    $region20: #{tpu_custom_call.1} parent=1 // pred_region
      _
    $region21: #{tpu_custom_call.1} parent=1 // pred_fallthru
      _
    // Predicated region
    $region22: #{tpu_custom_call.1} parent=1 // pred_check
      _
    $region23: #{tpu_custom_call.1} parent=1 // pred_check_branch
      %36 = sbr.rel (0) target = $region25
    $region24: #{tpu_custom_call.1} parent=1 // pred_region
      _
    $region25: #{tpu_custom_call.1} parent=1 // pred_fallthru
      _
    // Predicated region
    $region26: #{tpu_custom_call.1} parent=1 // pred_check
      _
    $region27: #{tpu_custom_call.1} parent=1 // pred_check_branch
      %38 = sbr.rel (0) target = $region29
    $region28: #{tpu_custom_call.1} parent=1 // pred_region
      %39 = dma.done [#allocation5], 256
    $region29: #{tpu_custom_call.1} parent=1 // pred_fallthru
      _
    %v41 = vld [vmem:[%s2] sm:$0xf]
    %v42 = vld [vmem:[#allocation4] sm:$0xf]
    %v43 = vld [vmem:[#allocation4 + $0x4] sm:$0xf]
    %v44 = vld [vmem:[#allocation4 + $0x8] sm:$0xf]
    %v45 = vld [vmem:[#allocation4 + $0xc] sm:$0xf]
    %v46 = vld [vmem:[%s4] sm:$0x1]
    %v48 = vlaneseq
    %v49 = vshrl.u32 %v48, 7
    %v50 = vsub.s32 0, %v49
    %v51 = vrot.slane %v46, %v50
    %v57 = vunpack.c.l.b16 %v42
    %v58 = vunpack.c.l.b16 %v43
    %v59 = vunpack.c.l.b16 %v44
    %v60 = vunpack.c.l.b16 %v45
    %v61 = vpack.c.b16 %v58, %v57
    %v62 = vpack.c.b16 %v60, %v59
    %vm65 = vcmask 261120
    %v67 = vsel %vm65, %v41, 0
    %69 = vmatprep.subr.bf16.mxu0 0
    %70 = vmatpush1.bf16.msra.mxu0 0
    %71 = vmatprep.subr.bf16.mxu0 0
    %72 = vmatpush1.bf16.msra.mxu0 0
    %73 = vmatprep.subr.bf16.mxu0 0
    %74 = vmatpush1.bf16.msra.mxu0 0
    %75 = vmatprep.subr.bf16.mxu0 0
    %76 = vmatpush1.bf16.msra.mxu0 0
    %77 = vmatprep.subr.bf16.mxu0 0
    %78 = vmatpush1.bf16.msra.mxu0 0
    %79 = vmatprep.subr.bf16.mxu0 0
    %80 = vmatpush1.bf16.msra.mxu0 0
    %81 = vmatprep.subr.bf16.mxu0 0
    %82 = vmatpush1.bf16.msra.mxu0 %v62
    %83 = vmatprep.subr.bf16.mxu0 0
    %84 = vmatpush1.bf16.msra.mxu0 %v61
    %85 = vmatprep.subr.bf16.mxu0 0
    %86 = vmatpush2.bf16.msra.mxu0 0
    %87 = vmatprep.subr.bf16.mxu0 0
    %88 = vmatpush2.bf16.msra.mxu0 0
    %89 = vmatprep.subr.bf16.mxu0 0
    %90 = vmatpush2.bf16.msra.mxu0 0
    %91 = vmatprep.subr.bf16.mxu0 0
    %92 = vmatpush2.bf16.msra.mxu0 0
    %93 = vmatprep.subr.bf16.mxu0 0
    %94 = vmatpush2.bf16.msra.mxu0 0
    %95 = vmatprep.subr.bf16.mxu0 0
    %96 = vmatpush2.bf16.msra.mxu0 0
    %97 = vmatprep.subr.bf16.mxu0 0
    %98 = vmatpush2.bf16.msra.mxu0 0
    %99 = vmatprep.subr.bf16.mxu0 0
    %100 = vmatpush2.bf16.msra.mxu0 0
    %101 = vmatprep.mubr.bf16.mxu0 0
    %102 = vmatmul.mubr.bf16.gmra.mxu0 %v67
    %v103 = vpop.f32.mrf.mxu0
    %v104 = vadd.f32 %v51, %v103
    %v105 = vpop.f32.mrf.mxu0
    %v106 = vpop.f32.mrf.mxu0
    %v107 = vpop.f32.mrf.mxu0
    %108 = vdwg.mxu0
    %s109 = smul.u32 0, 8
    %v110 = vlaneseq
    %v111 = vshrl.u32 %v110, 7
    %v112 = vstv %s109
    %v113 = vadd.s32 %v111, %v112
    %v114 = vlaneseq
    %v115 = vand.u32 %v114, 127
    %v116 = vmul.u32 %v113, 128
    %v117 = vadd.s32 %v116, %v115
    %s118 = sld [smem:[#allocation2]]
    %v119 = vstv %s118
    %v120 = vadd.s32 %v117, %v119
    %v121 = vshrl.u32 %v120, 16
    %v122 = vxor.u32 %v120, %v121
    %v123 = vmul.u32 %v122, 2146121005
    %v124 = vshrl.u32 %v123, 15
    %v125 = vxor.u32 %v123, %v124
    %v126 = vmul.u32 %v125, 2221713035
    %v127 = vshrl.u32 %v126, 16
    %v128 = vxor.u32 %v126, %v127
    %v129 = vshrl.u32 %v128, 31
    %vm130 = vcmp.eq.s32.totalorder %v129, 0
    %vm131 = vcmp.gt.f32.partialorder %v104, 0.0
    %vm132 = vmand %vm130, %vm131
    %v133 = vmul.f32 %v104, 2.0
    %v134 = vsel %vm132, %v133, 0.0
    %v135 = vld [vmem:[%s5] sm:$0x1]
    %s136 = sld [smem:[#allocation3]]
    %v137 = vstv %s136
    %138 = vmatprep.subr.mxu0 0.0
    %139 = vmatpush1.xpose.msra.mxu0 0.0
    %140 = vmatprep.subr.mxu0 0.0
    %141 = vmatpush1.xpose.msra.mxu0 0.0
    %142 = vmatprep.subr.mxu0 0.0
    %143 = vmatpush1.xpose.msra.mxu0 0.0
    %144 = vmatprep.subr.mxu0 0.0
    %145 = vmatpush1.xpose.msra.mxu0 0.0
    %146 = vmatprep.subr.mxu0 0.0
    %147 = vmatpush1.xpose.msra.mxu0 0.0
    %148 = vmatprep.subr.mxu0 0.0
    %149 = vmatpush1.xpose.msra.mxu0 0.0
    %150 = vmatprep.subr.mxu0 0.0
    %151 = vmatpush1.xpose.msra.mxu0 0.0
    %152 = vmatprep.subr.mxu0 0.0
    %153 = vmatpush1.xpose.msra.mxu0 0.0
    %154 = vmatprep.subr.mxu0 0.0
    %155 = vmatpush1.xpose.msra.mxu0 0.0
    %156 = vmatprep.subr.mxu0 0.0
    %157 = vmatpush1.xpose.msra.mxu0 0.0
    %158 = vmatprep.subr.mxu0 0.0
    %159 = vmatpush1.xpose.msra.mxu0 0.0
    %160 = vmatprep.subr.mxu0 0.0
    %161 = vmatpush1.xpose.msra.mxu0 0.0
    %162 = vmatprep.subr.mxu0 0.0
    %163 = vmatpush1.xpose.msra.mxu0 0.0
    %164 = vmatprep.subr.mxu0 0.0
    %165 = vmatpush1.xpose.msra.mxu0 0.0
    %166 = vmatprep.subr.mxu0 0.0
    %167 = vmatpush1.xpose.msra.mxu0 0.0
    %168 = vmatprep.subr.mxu0 0.0
    %169 = vmatpush1.xpose.msra.mxu0 %v134
    %170 = vmatprep.subr.mxu0 0.0
    %171 = vmatpush2.xpose.msra.mxu0 0.0
    %172 = vmatprep.subr.mxu0 0.0
    %173 = vmatpush2.xpose.msra.mxu0 0.0
    %174 = vmatprep.subr.mxu0 0.0
    %175 = vmatpush2.xpose.msra.mxu0 0.0
    %176 = vmatprep.subr.mxu0 0.0
    %177 = vmatpush2.xpose.msra.mxu0 0.0
    %178 = vmatprep.subr.mxu0 0.0
    %179 = vmatpush2.xpose.msra.mxu0 0.0
    %180 = vmatprep.subr.mxu0 0.0
    %181 = vmatpush2.xpose.msra.mxu0 0.0
    %182 = vmatprep.subr.mxu0 0.0
    %183 = vmatpush2.xpose.msra.mxu0 0.0
    %184 = vmatprep.subr.mxu0 0.0
    %185 = vmatpush2.xpose.msra.mxu0 0.0
    %186 = vmatprep.subr.mxu0 0.0
    %187 = vmatpush2.xpose.msra.mxu0 0.0
    %188 = vmatprep.subr.mxu0 0.0
    %189 = vmatpush2.xpose.msra.mxu0 0.0
    %190 = vmatprep.subr.mxu0 0.0
    %191 = vmatpush2.xpose.msra.mxu0 0.0
    %192 = vmatprep.subr.mxu0 0.0
    %193 = vmatpush2.xpose.msra.mxu0 0.0
    %194 = vmatprep.subr.mxu0 0.0
    %195 = vmatpush2.xpose.msra.mxu0 0.0
    %196 = vmatprep.subr.mxu0 0.0
    %197 = vmatpush2.xpose.msra.mxu0 0.0
    %198 = vmatprep.subr.mxu0 0.0
    %199 = vmatpush2.xpose.msra.mxu0 0.0
    %200 = vmatprep.subr.mxu0 0.0
    %201 = vmatpush2.xpose.msra.mxu0 0.0
    %202 = vmatprep.mubr.f32.mxu0 0.0
    %203 = vmatmul.mubr.f32.gmra.mxu0 %v135
    %v204 = vpop.f32.mrf.mxu0
    %v205 = vadd.f32 %v137, %v204
    %v206 = vpop.f32.mrf.mxu0
    %207 = vdwg.mxu0
    %vm208 = vcmask 57344
    %209 = vst.msk [vmem:[#allocation7] sm:$0x1] %vm208, %v205
    // Predicated region
    $region30: #{tpu_custom_call.1} parent=1 // pred_check
      _
    $region31: #{tpu_custom_call.1} parent=1 // pred_check_branch
      %211 = sbr.rel (0) target = $region33
    $region32: #{tpu_custom_call.1} parent=1 // pred_region
      %s213 = ssub.s32 16, 16
      %214 = vsyncadd [#allocation6], %s213
      %s216 = sshll.u32 [#allocation7], 4
      %s217 = int_to_ptr.vmem [resolvable:$true] %s216
      %219 = dma.vmem_to_hbm [thread:$0]  %s217, 16, %s6, [#allocation6]
    $region33: #{tpu_custom_call.1} parent=1 // pred_fallthru
      _
    // Predicated region
    $region34: #{tpu_custom_call.1} parent=1 // pred_check
      _
    $region35: #{tpu_custom_call.1} parent=1 // pred_check_branch
      %221 = sbr.rel (0) target = $region37
    $region36: #{tpu_custom_call.1} parent=1 // pred_region
      %222 = dma.done [#allocation6], 16
    $region37: #{tpu_custom_call.1} parent=1 // pred_fallthru
      _
    %223 = vsyncpa [#allocation5], 1
    %224 = vsyncpa [#allocation6], 1

</llo_original>
